<compile_context>
chip_gen: v6e
topology: v6e:2x2x1
jax: 0.10.0
libtpu: 0.0.40
codegen_flags: <defaults>
</compile_context>

<pallas_src>
import jax
import jax.numpy as jnp
from jax import lax
from jax.experimental import pallas as pl
from jax.experimental.pallas import tpu as pltpu


# ----------------------------------------------------------------------------
# Kernel: one (batch row, patch tile) per grid step.
#   x_ref : (1, C*ps, tile_p)  patch-major input slab (patches on lanes)
#   w_ref : (C*ps, E)          flattened conv weight (grid-invariant)
#   b_ref : (1, E)             conv bias
#   o_ref : (1, tile_p, E)     embedded patches (E on lanes -> dense stores)
# ----------------------------------------------------------------------------
def _patch_embed_kernel(x_ref, w_ref, b_ref, o_ref):
    acc = lax.dot_general(
        x_ref[0], w_ref[...],
        dimension_numbers=(((0,), (0,)), ((), ())),   # contract K = C*ps
        preferred_element_type=jnp.float32)           # (tile_p, E) f32
    o_ref[0] = (acc + b_ref[...].astype(jnp.float32)).astype(o_ref.dtype)


def signal_embed_soft(x, weight, bias, *, patch_size, tile_p=None,
                      compute_dtype=None, out_dtype=None,
                      vmem_budget_bytes=10 * 1024 * 1024):
    """x: (B, C, L); weight: (C, ps, E); bias: (1, E) -> (B, L//ps, E)."""
    B, C, L = x.shape
    ps = patch_size
    P = L // ps                       # Conv1d output length for stride == kernel
    assert P >= 1, "signal shorter than one patch"
    E = weight.shape[-1]
    assert weight.shape == (C, ps, E)
    # TODO(synk): the torch module's `L == sig_len` assert is a host-side check.

    out_dtype = out_dtype or x.dtype
    in_dtype = compute_dtype or x.dtype
    cps = C * ps

    # Patch-major relayout of the (small) input: x_t[b, c*ps+k, p] = x[b, c, p*ps+k].
    # Trailing L % ps samples are ignored by the strided conv.
    x_t = (x[:, :, :P * ps]
           .reshape(B, C, P, ps)
           .transpose(0, 1, 3, 2)
           .reshape(B, cps, P))
    w2 = weight.reshape(cps, E)       # torch W.permute(1,2,0) flattened over (c,k)
    b2 = bias.reshape(1, E)
    if compute_dtype is not None:
        x_t = x_t.astype(compute_dtype)
        w2 = w2.astype(compute_dtype)

    in_item = jnp.dtype(in_dtype).itemsize
    out_item = jnp.dtype(out_dtype).itemsize

    # --- tile sizing from a per-step VMEM budget (independent of P's divisors).
    if tile_p is None:
        bytes_per_patch_row = (2 * E * out_item       # double-buffered output tile
                               + E * 4                # f32 matmul/bias temporary
                               + 2 * cps * in_item)   # double-buffered x tile
        tile_p = int(vmem_budget_bytes // max(bytes_per_patch_row, 1))
        tile_p = max(128, min(tile_p, 4096)) // 128 * 128
        if tile_p >= P:
            tile_p = P                                # single full-P block
            if B == 1 and P >= 256:
                # keep >= 2 parallel grid steps so both v7x TensorCores get work
                tile_p = ((P + 1) // 2 + 127) // 128 * 128
    else:
        tile_p = min(int(tile_p), P)
    # (8,128) rule: minor/second-minor block dims must be 128/8-multiples or full.
    assert tile_p == P or tile_p % 128 == 0, tile_p

    grid_p = pl.cdiv(P, tile_p)       # boundary blocks are clipped automatically

    est_vmem = (2 * tile_p * E * out_item + tile_p * E * 4
                + 2 * cps * tile_p * in_item + cps * E * in_item + E * 4)
    vmem_limit = int(min(max(32 * 1024 * 1024, 2 * est_vmem), 100 * 1024 * 1024))

    return pl.pallas_call(
        _patch_embed_kernel,
        out_shape=jax.ShapeDtypeStruct((B, P, E), out_dtype),
        grid_spec=pltpu.PrefetchScalarGridSpec(
            num_scalar_prefetch=0,
            grid=(B, grid_p),
            in_specs=[
                pl.BlockSpec((1, cps, tile_p), lambda b, j: (b, 0, j)),
                pl.BlockSpec((cps, E), lambda b, j: (0, 0),
                             pipeline_mode=pl.Buffered(1)),   # grid-invariant
                pl.BlockSpec((1, E), lambda b, j: (0, 0),
                             pipeline_mode=pl.Buffered(1)),
            ],
            out_specs=pl.BlockSpec((1, tile_p, E), lambda b, j: (b, j, 0)),
        ),
        compiler_params=pltpu.CompilerParams(
            dimension_semantics=("parallel", "parallel"),
            vmem_limit_bytes=vmem_limit),
    )(x_t, w2, b2)


def init_params(key, in_chans, patch_size, embed_dim):
    """Conv1d-style init. Torch layout (E, C, ps) -> stored as (C, ps, E)."""
    kw, kb = jax.random.split(key)
    fan_in = in_chans * patch_size
    bound = 1.0 / jnp.sqrt(fan_in)
    weight = jax.random.uniform(kw, (in_chans, patch_size, embed_dim),
                                jnp.float32, -bound, bound)
    bias = jax.random.uniform(kb, (1, embed_dim), jnp.float32, -bound, bound)
    return weight, bias


def _reference(x, weight, bias, patch_size):
    B, C, L = x.shape
    P = L // patch_size
    xp = x[:, :, :P * patch_size].reshape(B, C, P, patch_size)
    return jnp.einsum("bcpk,cke->bpe", xp, weight) + bias.reshape(1, 1, -1)


if __name__ == "__main__":
    key = jax.random.PRNGKey(0)
    k_x1, k_p1, k_x2, k_p2, k_x3, k_p3 = jax.random.split(key, 6)

    # --- Test 1: multi-channel config, P a power of two (auto tile = full P).
    B, C, L, ps, E = 2, 2, 256, 16, 128
    x = jax.random.normal(k_x1, (B, C, L), jnp.float32)
    w, b = init_params(k_p1, C, ps, E)
    out = jax.block_until_ready(signal_embed_soft(x, w, b, patch_size=ps))
    ref = _reference(x, w, b, ps)
    assert out.shape == (B, L // ps, E)
    assert bool(jnp.all(jnp.isfinite(out)))
    assert jnp.allclose(out, ref, atol=2e-2, rtol=2e-2), \
        float(jnp.max(jnp.abs(out - ref)))

    # --- Test 2: default-module style (in_chans=1, sig_len=750 not a multiple
    # of patch_size -> trailing samples dropped).
    B2, C2, L2, ps2, E2 = 2, 1, 750, 16, 128
    x2 = jax.random.normal(k_x2, (B2, C2, L2), jnp.float32)
    w2, b2 = init_params(k_p2, C2, ps2, E2)
    out2 = jax.block_until_ready(signal_embed_soft(x2, w2, b2, patch_size=ps2))
    ref2 = _reference(x2, w2, b2, ps2)
    assert out2.shape == (B2, L2 // ps2, E2)
    assert bool(jnp.all(jnp.isfinite(out2)))
    assert jnp.allclose(out2, ref2, atol=2e-2, rtol=2e-2), \
        float(jnp.max(jnp.abs(out2 - ref2)))

    # --- Test 3: long signal, explicit 128-patch tiles with P=259 not divisible
    # by the tile -> exercises the pl.cdiv grid + boundary-clipping path.
    B3, C3, L3, ps3, E3 = 1, 1, 259 * 16, 16, 128
    x3 = jax.random.normal(k_x3, (B3, C3, L3), jnp.float32)
    w3, b3 = init_params(k_p3, C3, ps3, E3)
    out3 = jax.block_until_ready(
        signal_embed_soft(x3, w3, b3, patch_size=ps3, tile_p=128))
    ref3 = _reference(x3, w3, b3, ps3)
    assert out3.shape == (B3, L3 // ps3, E3)
    assert bool(jnp.all(jnp.isfinite(out3)))
    assert jnp.allclose(out3, ref3, atol=2e-2, rtol=2e-2), \
        float(jnp.max(jnp.abs(out3 - ref3)))

    # --- Test 4: bf16 compute path (halved x/W DMA bytes), f32 accumulation.
    out4 = jax.block_until_ready(
        signal_embed_soft(x, w, b, patch_size=ps, compute_dtype=jnp.bfloat16))
    assert jnp.allclose(out4, ref, atol=6e-2, rtol=6e-2), \
        float(jnp.max(jnp.abs(out4 - ref)))

    print("KERNEL_OK")
</pallas_src>

<mosaic_0001>
module attributes {stable_mosaic.version = 11 : i64} {
  func.func @_patch_embed_kernel(%arg0: i32, %arg1: i32, %arg2: memref<1x32x16xf32, #tpu.memory_space<vmem>>, %arg3: memref<32x128xf32, #tpu.memory_space<vmem>>, %arg4: memref<1x128xf32, #tpu.memory_space<vmem>>, %arg5: memref<1x16x128xf32, #tpu.memory_space<vmem>>) attributes {dimension_semantics = [#tpu.dimension_semantics<parallel>, #tpu.dimension_semantics<parallel>], iteration_bounds = array<i64: 2, 1>, scalar_prefetch = 0 : i64, scratch_operands = 0 : i64, tpu.core_type = #tpu.core_type<tc>, window_params = [{transform_indices = @transform_0, window_bounds = array<i64: 1, 32, 16>}, {pipeline_mode = #tpu.pipeline_mode<synchronous>, transform_indices = @transform_1, window_bounds = array<i64: 32, 128>}, {pipeline_mode = #tpu.pipeline_mode<synchronous>, transform_indices = @transform_2, window_bounds = array<i64: 1, 128>}, {transform_indices = @transform_3, window_bounds = array<i64: 1, 16, 128>}]} {
    %c0 = arith.constant 0 : index
    %c0_0 = arith.constant 0 : index
    %c0_1 = arith.constant 0 : index
    %0 = vector.load %arg2[%c0, %c0_0, %c0_1] : memref<1x32x16xf32, #tpu.memory_space<vmem>>, vector<1x32x16xf32>
    %1 = vector.shape_cast %0 : vector<1x32x16xf32> to vector<32x16xf32>
    %c0_2 = arith.constant 0 : index
    %c0_3 = arith.constant 0 : index
    %2 = vector.load %arg3[%c0_2, %c0_3] : memref<32x128xf32, #tpu.memory_space<vmem>>, vector<32x128xf32>
    %cst = arith.constant dense<0.000000e+00> : vector<16x128xf32>
    %3 = tpu.matmul %1, %2, %cst {dimension_numbers = #tpu.dot_dimension_numbers<[0], [0], [1], [1], [0, 1, 1, 1], [], []>} : vector<32x16xf32>, vector<32x128xf32>, vector<16x128xf32> -> vector<16x128xf32>
    %c0_4 = arith.constant 0 : index
    %c0_5 = arith.constant 0 : index
    %4 = vector.load %arg4[%c0_4, %c0_5] : memref<1x128xf32, #tpu.memory_space<vmem>>, vector<1x128xf32>
    %5 = vector.broadcast %4 : vector<1x128xf32> to vector<16x128xf32>
    %6 = arith.addf %3, %5 : vector<16x128xf32>
    %c0_6 = arith.constant 0 : index
    %c0_7 = arith.constant 0 : index
    %c0_8 = arith.constant 0 : index
    %7 = vector.load %arg5[%c0_6, %c0_7, %c0_8] : memref<1x16x128xf32, #tpu.memory_space<vmem>>, vector<1x16x128xf32>
    %8 = vector.shape_cast %7 : vector<1x16x128xf32> to vector<16x128xf32>
    %9 = vector.shape_cast %6 : vector<16x128xf32> to vector<1x16x128xf32>
    tpu.vector_store %arg5[%c0_6, %c0_7, %c0_8], %9 {strides = array<i32>} : memref<1x16x128xf32, #tpu.memory_space<vmem>>, vector<1x16x128xf32>,
    return
  }
  func.func @transform_0(%arg0: i32, %arg1: i32) -> (i32, i32, i32) {
    %c0_i32 = arith.constant 0 : i32
    %c0_i32_0 = arith.constant 0 : i32
    return %arg0, %c0_i32, %arg1 : i32, i32, i32
  }
  func.func @transform_1(%arg0: i32, %arg1: i32) -> (i32, i32) {
    %c0_i32 = arith.constant 0 : i32
    %c0_i32_0 = arith.constant 0 : i32
    %c0_i32_1 = arith.constant 0 : i32
    return %c0_i32, %c0_i32_0 : i32, i32
  }
  func.func @transform_2(%arg0: i32, %arg1: i32) -> (i32, i32) {
    %c0_i32 = arith.constant 0 : i32
    %c0_i32_0 = arith.constant 0 : i32
    %c0_i32_1 = arith.constant 0 : i32
    return %c0_i32, %c0_i32_0 : i32, i32
  }
  func.func @transform_3(%arg0: i32, %arg1: i32) -> (i32, i32, i32) {
    %c0_i32 = arith.constant 0 : i32
    %c0_i32_0 = arith.constant 0 : i32
    return %arg0, %arg1, %c0_i32 : i32, i32, i32
  }
}

</mosaic_0001>

<llo_original>
// kernel: tpu_custom_call.1
$region0: #{tpu_custom_call.1}
  #allocation0 [shape = 'u32[]', space=smem, size = 0x4, offset = 0x4, fixed_abs, tag = 'smem constant byte address 0x4 - core index']
  #allocation1 [shape = 'u32[144,128]{1,0:T(1,128)}', space=vmem, size = 0x12000, scoped, tag = 'internal scratch']
  %s0 = inlined_call_operand.vmem [shape: f32[2,32,16], index: 0, kind: input, shape index: {}]
  %s1 = inlined_call_operand.vmem [shape: f32[32,128], index: 1, kind: input, shape index: {}]
  %s2 = inlined_call_operand.vmem [shape: f32[1,128], index: 2, kind: input, shape index: {}]
  %s3 = inlined_call_operand.hbm [shape: f32[2,16,128], index: 3, kind: output, shape index: {}]
  %s4 = sld [smem:[#allocation0]]
  $region45: #{tpu_custom_call.1} parent=0
    _
  %s6 = ssub.s32 1, %s4
  %s7 = scalar_select 0, %s6, %s4
  $region1: #{tpu_custom_call.1} parent=0
    #allocation2 [shape = 'u8[16384]{0}', space=vmem, size = 0x4000, scoped, tag = 'output window, operand 0']
    #allocation3 [shape = 's32[2]{0}', space=sflag, size = 0x8, scoped, tag = 'scoped memory for tpu_custom_call.1']
    %8 = vsyncpa [#allocation3], 0
    %s9 = scalar_lea.sflag [#allocation3], 1
    %10 = vsyncpa %s9, 0
    loop: start=0, step=1, limit=4
    $region2: #{tpu_custom_call.1} parent=1 // loop_pre_header
      _
    $region3: #{tpu_custom_call.1} parent=1 // loop_header
      %s12 = sphi 0, %s16
      %p13 = scmp.ge.s32.totalorder %s12, 4
      %s19 = sphi 0, %s31
      %s20 = sphi 0, %s27
      %s21 = sphi 0, %s19
      %s22 = sphi 0, %s20
      %s23 = sphi 0, %s21
      %s24 = sphi 0, %s22
      %s36 = sphi 0, %s38
      %s39 = sphi 0, %s36
      %s40 = sphi 0, %s39
      %s56 = sphi 0, %s40
      %s60 = sphi 0, %s60
      %s62 = sphi 0, %s60
      %s63 = sphi 0, %s62
      %s77 = sphi 0, %s63
      %s81 = sphi 0, %s81
      %s83 = sphi 0, %s81
      %s84 = sphi 0, %s83
      %s98 = sphi 0, %s84
      %s106 = sphi 0, %s108
      %s109 = sphi 0, %s106
      %s110 = sphi 0, %s109
      %s126 = sphi 0, %s110
    $region4: #{tpu_custom_call.1} parent=1 // loop_header_branch
      %15 = sbr.rel (%p13) target = $region8
    $region5: #{tpu_custom_call.1} parent=1 // loop_body
      %s17 = ssub.s32 %s12, 1
      %s18 = ssub.s32 %s12, 2
      %s25 = sadd.s32 1, %s20
      %p26 = scmp.ge.s32.totalorder %s25, 1
      %s27 = scalar_select %p26, 0, %s25
      %s28 = sadd.s32 1, %s19
      %s29 = scalar_select %p26, %s28, %s19
      %p30 = scmp.ge.s32.totalorder %s29, 2
      %s31 = scalar_select %p30, 0, %s29
      %s32 = ssub.s32 %s19, %s31
      %s33 = ssub.s32 %s20, %s27
      %s34 = sor.u32 %s32, %s33
      %p35 = scmp.eq.s32.totalorder %s34, 0
      %s37 = sadd.s32 %s36, 1
      %s38 = scalar_select %p35, %s36, %s37
      %p41 = pneg %p35
      %p42 = scmp.eq.s32.totalorder %s12, 1
      %p43 = por %p41, %p42
      %p44 = scmp.ne.s32.totalorder %s36, %s39
      %p45 = scmp.eq.s32.totalorder %s12, 0
      %p46 = por %p44, %p45
      %p47 = scmp.ne.s32.totalorder %s36, %s39
      %p48 = scmp.eq.s32.totalorder %s17, 1
      %p49 = por %p47, %p48
      %p50 = scmp.ne.s32.totalorder %s39, %s40
      %p51 = scmp.eq.s32.totalorder %s17, 0
      %p52 = por %p50, %p51
      %p53 = scmp.ne.s32.totalorder %s39, %s40
      %p54 = scmp.eq.s32.totalorder %s18, 1
      %p55 = por %p53, %p54
      %p57 = scmp.ne.s32.totalorder %s40, %s56
      %p58 = scmp.eq.s32.totalorder %s18, 0
      %p59 = por %p57, %p58
      %s61 = sadd.s32 %s60, 1
      %p64 = scmp.eq.s32.totalorder %s12, 1
      %p65 = scmp.ne.s32.totalorder %s60, %s62
      %p66 = scmp.eq.s32.totalorder %s12, 0
      %p67 = por %p65, %p66
      %p68 = scmp.ne.s32.totalorder %s60, %s62
      %p69 = scmp.eq.s32.totalorder %s17, 1
      %p70 = por %p68, %p69
      %p71 = scmp.ne.s32.totalorder %s62, %s63
      %p72 = scmp.eq.s32.totalorder %s17, 0
      %p73 = por %p71, %p72
      %p74 = scmp.ne.s32.totalorder %s62, %s63
      %p75 = scmp.eq.s32.totalorder %s18, 1
      %p76 = por %p74, %p75
      %p78 = scmp.ne.s32.totalorder %s63, %s77
      %p79 = scmp.eq.s32.totalorder %s18, 0
      %p80 = por %p78, %p79
      %s82 = sadd.s32 %s81, 1
      %p85 = scmp.eq.s32.totalorder %s12, 1
      %p86 = scmp.ne.s32.totalorder %s81, %s83
      %p87 = scmp.eq.s32.totalorder %s12, 0
      %p88 = por %p86, %p87
      %p89 = scmp.ne.s32.totalorder %s81, %s83
      %p90 = scmp.eq.s32.totalorder %s17, 1
      %p91 = por %p89, %p90
      %p92 = scmp.ne.s32.totalorder %s83, %s84
      %p93 = scmp.eq.s32.totalorder %s17, 0
      %p94 = por %p92, %p93
      %p95 = scmp.ne.s32.totalorder %s83, %s84
      %p96 = scmp.eq.s32.totalorder %s18, 1
      %p97 = por %p95, %p96
      %p99 = scmp.ne.s32.totalorder %s84, %s98
      %p100 = scmp.eq.s32.totalorder %s18, 0
      %p101 = por %p99, %p100
      %s102 = ssub.s32 %s19, %s31
      %s103 = ssub.s32 %s20, %s27
      %s104 = sor.u32 %s102, %s103
      %p105 = scmp.eq.s32.totalorder %s104, 0
      %s107 = sadd.s32 %s106, 1
      %s108 = scalar_select %p105, %s106, %s107
      %p111 = pneg %p105
      %p112 = scmp.eq.s32.totalorder %s12, 1
      %p113 = por %p111, %p112
      %p114 = scmp.ne.s32.totalorder %s106, %s109
      %p115 = scmp.eq.s32.totalorder %s12, 0
      %p116 = por %p114, %p115
      %p117 = scmp.ne.s32.totalorder %s106, %s109
      %p118 = scmp.eq.s32.totalorder %s17, 1
      %p119 = por %p117, %p118
      %p120 = scmp.ne.s32.totalorder %s109, %s110
      %p121 = scmp.eq.s32.totalorder %s17, 0
      %p122 = por %p120, %p121
      %p123 = scmp.ne.s32.totalorder %s109, %s110
      %p124 = scmp.eq.s32.totalorder %s18, 1
      %p125 = por %p123, %p124
      %p127 = scmp.ne.s32.totalorder %s110, %s126
      %p128 = scmp.eq.s32.totalorder %s18, 0
      %p129 = por %p127, %p128
      %p130 = scmp.le.s32.totalorder 1, %s12
      %p131 = scmp.lt.s32.totalorder %s12, 3
      %p132 = pnand %p130, %p131
      %p133 = pneg %p132
      // Predicated region
      $region9: #{tpu_custom_call.1} parent=5 // pred_check
        _
      $region10: #{tpu_custom_call.1} parent=5 // pred_check_branch
        %135 = sbr.rel (%p132) target = $region12
      $region11: #{tpu_custom_call.1} parent=5 // pred_region
        %s136 = ssub.s32 %s12, 1
        // Predicated region
        $region13: #{tpu_custom_call.1} parent=11 // pred_check
          %p137 = pneg %p73
        $region14: #{tpu_custom_call.1} parent=11 // pred_check_branch
          %139 = sbr.rel (%p137) target = $region16
        $region15: #{tpu_custom_call.1} parent=11 // pred_region
          _
        $region16: #{tpu_custom_call.1} parent=11 // pred_fallthru
          _
        // Predicated region
        $region17: #{tpu_custom_call.1} parent=11 // pred_check
          %p140 = pneg %p94
        $region18: #{tpu_custom_call.1} parent=11 // pred_check_branch
          %142 = sbr.rel (%p140) target = $region20
        $region19: #{tpu_custom_call.1} parent=11 // pred_region
          _
        $region20: #{tpu_custom_call.1} parent=11 // pred_fallthru
          _
      $region12: #{tpu_custom_call.1} parent=5 // pred_fallthru
        _
      %p143 = scmp.lt.s32.totalorder %s12, 2
      // Predicated region
      $region21: #{tpu_custom_call.1} parent=5 // pred_check
        %p144 = pneg %p143
      $region22: #{tpu_custom_call.1} parent=5 // pred_check_branch
        %146 = sbr.rel (%p144) target = $region24
      $region23: #{tpu_custom_call.1} parent=5 // pred_region
        // Predicated region
        $region25: #{tpu_custom_call.1} parent=23 // pred_check
          %p147 = pneg %p46
        $region26: #{tpu_custom_call.1} parent=23 // pred_check_branch
          %149 = sbr.rel (%p147) target = $region28
        $region27: #{tpu_custom_call.1} parent=23 // pred_region
          %p150 = scmp.lt.s32.totalorder %s19, 1
          %s151 = scalar_select %p150, %s19, 1
          %p152 = scmp.lt.s32.totalorder %s20, 0
          %s153 = scalar_select %p152, %s20, 0
          %s154 = smul.addr %s151, 4
          %s155 = sadd.s32 %s153, %s154
          %s156 = smul.addr %s155, 8
          %s157 = scalar_lea.vmem %s0, %s156
        $region28: #{tpu_custom_call.1} parent=23 // pred_fallthru
          _
      $region24: #{tpu_custom_call.1} parent=5 // pred_fallthru
        _
      %p158 = scmp.le.s32.totalorder 1, %s12
      %p159 = scmp.lt.s32.totalorder %s12, 3
      %p160 = pnand %p158, %p159
      %p161 = pneg %p160
      // Predicated region
      $region29: #{tpu_custom_call.1} parent=5 // pred_check
        _
      $region30: #{tpu_custom_call.1} parent=5 // pred_check_branch
        %163 = sbr.rel (%p160) target = $region32
      $region31: #{tpu_custom_call.1} parent=5 // pred_region
        %s164 = ssub.s32 %s12, 1
        %p165 = scmp.lt.s32.totalorder %s21, 1
        %s166 = scalar_select %p165, %s21, 1
        %p167 = scmp.lt.s32.totalorder %s22, 0
        %s168 = scalar_select %p167, %s22, 0
        %s169 = smul.addr %s166, 4
        %s170 = sadd.s32 %s168, %s169
        %s171 = smul.addr %s170, 8
        %s172 = scalar_lea.vmem %s0, %s171
        %p173 = pneg %p52
        %p174 = pneg %p49
        %p175 = pneg %p73
        %p176 = pneg %p70
        %p177 = pneg %p94
        %p178 = pneg %p91
        %p179 = pneg %p122
        %p180 = pneg %p119
        %s181 = sand.u32 %s109, 1
        %s182 = scalar_lea.sflag [#allocation3], %s181
        %s183 = sand.u32 %s109, 1
        %s184 = smul.addr %s183, 16
        %s185 = scalar_lea.vmem [#allocation2], %s184
        %p186 = scmp.lt.s32.totalorder %s21, 1
        %s187 = scalar_select %p186, %s21, 1
        %p188 = scmp.lt.s32.totalorder %s22, 0
        %s189 = scalar_select %p188, %s22, 0
        %s190 = smul.addr %s187, 4
        %s191 = sadd.s32 %s189, %s190
        %s192 = smul.addr %s191, 8
        %s193 = scalar_lea.vmem %s0, %s192
        %s194 = smul.u32 2, %s22
        %v195 = vld [vmem:[%s193] sm:$0xff]
        %v196 = vld [vmem:[%s193 + $0x8] sm:$0xff]
        %v197 = vld [vmem:[%s193 + $0x10] sm:$0xff]
        %v198 = vld [vmem:[%s193 + $0x18] sm:$0xff]
        %v199 = vld [vmem:[%s1] sm:$0xff]
        %v200 = vld [vmem:[%s1 + $0x8] sm:$0xff]
        %v201 = vld [vmem:[%s1 + $0x10] sm:$0xff]
        %v202 = vld [vmem:[%s1 + $0x18] sm:$0xff]
        %v203 = vld [vmem:[%s2] sm:$0x1]
        %v205 = vlaneseq
        %v206 = vshrl.u32 %v205, 7
        %v207 = vsub.s32 0, %v206
        %v208 = vrot.slane %v203, %v207
        %210 = vxpose.xlu0.b32.start [1/16] %v195, 128
        %211 = vxpose.xlu0.b32.cont [2/16] %v196, 128
        %212 = vxpose.xlu0.b32.cont [3/16] %v197, 128
        %213 = vxpose.xlu0.b32.cont [4/16] %v198, 128
        %214 = vxpose.xlu0.b32.cont [5/16] 0.0, 128
        %215 = vxpose.xlu0.b32.cont [6/16] 0.0, 128
        %216 = vxpose.xlu0.b32.cont [7/16] 0.0, 128
        %217 = vxpose.xlu0.b32.cont [8/16] 0.0, 128
        %218 = vxpose.xlu0.b32.cont [9/16] 0.0, 128
        %219 = vxpose.xlu0.b32.cont [10/16] 0.0, 128
        %220 = vxpose.xlu0.b32.cont [11/16] 0.0, 128
        %221 = vxpose.xlu0.b32.cont [12/16] 0.0, 128
        %222 = vxpose.xlu0.b32.cont [13/16] 0.0, 128
        %223 = vxpose.xlu0.b32.cont [14/16] 0.0, 128
        %224 = vxpose.xlu0.b32.cont [15/16] 0.0, 128
        %225 = vxpose.xlu0.b32.end [16/16] 0.0, 128
        %v226 = vpop.trf.xlu0
        %v227 = vpop.trf.xlu0
        %v228 = vpop.trf.xlu0
        %v229 = vpop.trf.xlu0
        %v230 = vpop.trf.xlu0
        %v231 = vpop.trf.xlu0
        %v232 = vpop.trf.xlu0
        %v233 = vpop.trf.xlu0
        %v234 = vpop.trf.xlu0
        %v235 = vpop.trf.xlu0
        %v236 = vpop.trf.xlu0
        %v237 = vpop.trf.xlu0
        %v238 = vpop.trf.xlu0
        %v239 = vpop.trf.xlu0
        %v240 = vpop.trf.xlu0
        %v241 = vpop.trf.xlu0
        %vm242 = vcmask 261120
        %v244 = vsel %vm242, %v226, 0
        %v247 = vsel %vm242, %v227, 0
        %249 = vmatprep.subr.mxu0 0.0
        %250 = vmatpush1.msra.mxu0 0.0
        %251 = vmatprep.subr.mxu0 0.0
        %252 = vmatpush1.msra.mxu0 0.0
        %253 = vmatprep.subr.mxu0 0.0
        %254 = vmatpush1.msra.mxu0 0.0
        %255 = vmatprep.subr.mxu0 0.0
        %256 = vmatpush1.msra.mxu0 0.0
        %257 = vmatprep.subr.mxu0 0.0
        %258 = vmatpush1.msra.mxu0 0.0
        %259 = vmatprep.subr.mxu0 0.0
        %260 = vmatpush1.msra.mxu0 0.0
        %261 = vmatprep.subr.mxu0 0.0
        %262 = vmatpush1.msra.mxu0 0.0
        %263 = vmatprep.subr.mxu0 0.0
        %264 = vmatpush1.msra.mxu0 0.0
        %265 = vmatprep.subr.mxu0 0.0
        %266 = vmatpush1.msra.mxu0 0.0
        %267 = vmatprep.subr.mxu0 0.0
        %268 = vmatpush1.msra.mxu0 0.0
        %269 = vmatprep.subr.mxu0 0.0
        %270 = vmatpush1.msra.mxu0 0.0
        %271 = vmatprep.subr.mxu0 0.0
        %272 = vmatpush1.msra.mxu0 0.0
        %273 = vmatprep.subr.mxu0 0.0
        %274 = vmatpush1.msra.mxu0 %v202
        %275 = vmatprep.subr.mxu0 0.0
        %276 = vmatpush1.msra.mxu0 %v201
        %277 = vmatprep.subr.mxu0 0.0
        %278 = vmatpush1.msra.mxu0 %v200
        %279 = vmatprep.subr.mxu0 0.0
        %280 = vmatpush1.msra.mxu0 %v199
        %281 = vmatprep.subr.mxu0 0.0
        %282 = vmatpush2.msra.mxu0 0.0
        %283 = vmatprep.subr.mxu0 0.0
        %284 = vmatpush2.msra.mxu0 0.0
        %285 = vmatprep.subr.mxu0 0.0
        %286 = vmatpush2.msra.mxu0 0.0
        %287 = vmatprep.subr.mxu0 0.0
        %288 = vmatpush2.msra.mxu0 0.0
        %289 = vmatprep.subr.mxu0 0.0
        %290 = vmatpush2.msra.mxu0 0.0
        %291 = vmatprep.subr.mxu0 0.0
        %292 = vmatpush2.msra.mxu0 0.0
        %293 = vmatprep.subr.mxu0 0.0
        %294 = vmatpush2.msra.mxu0 0.0
        %295 = vmatprep.subr.mxu0 0.0
        %296 = vmatpush2.msra.mxu0 0.0
        %297 = vmatprep.subr.mxu0 0.0
        %298 = vmatpush2.msra.mxu0 0.0
        %299 = vmatprep.subr.mxu0 0.0
        %300 = vmatpush2.msra.mxu0 0.0
        %301 = vmatprep.subr.mxu0 0.0
        %302 = vmatpush2.msra.mxu0 0.0
        %303 = vmatprep.subr.mxu0 0.0
        %304 = vmatpush2.msra.mxu0 0.0
        %305 = vmatprep.subr.mxu0 0.0
        %306 = vmatpush2.msra.mxu0 0.0
        %307 = vmatprep.subr.mxu0 0.0
        %308 = vmatpush2.msra.mxu0 0.0
        %309 = vmatprep.subr.mxu0 0.0
        %310 = vmatpush2.msra.mxu0 0.0
        %311 = vmatprep.subr.mxu0 0.0
        %312 = vmatpush2.msra.mxu0 0.0
        %313 = vmatprep.mubr.f32.mxu0 0.0
        %314 = vmatmul.mubr.f32.gmra.mxu0 %v244
        %v315 = vpop.f32.mrf.mxu0
        %v316 = vadd.f32 %v208, %v315
        %v317 = vpop.f32.mrf.mxu0
        %318 = vmatprep.mubr.f32.mxu0 0.0
        %319 = vmatmul.mubr.f32.gmra.mxu0 %v247
        %v320 = vpop.f32.mrf.mxu0
        %v321 = vadd.f32 %v208, %v320
        %v322 = vpop.f32.mrf.mxu0
        %323 = vdwg.mxu0
        %324 = vst [vmem:[%s185] sm:$0xff] %v316
        %325 = vst [vmem:[%s185 + $0x8] sm:$0xff] %v321
        %s326 = sand.u32 %s109, 1
        %s327 = scalar_lea.sflag [#allocation3], %s326
        %s328 = sand.u32 %s109, 1
        %s329 = smul.addr %s328, 16
        %s330 = scalar_lea.vmem [#allocation2], %s329
        // Predicated region
        $region33: #{tpu_custom_call.1} parent=31 // pred_check
          %p331 = pneg %p119
        $region34: #{tpu_custom_call.1} parent=31 // pred_check_branch
          %333 = sbr.rel (%p331) target = $region36
        $region35: #{tpu_custom_call.1} parent=31 // pred_region
          %s334 = smul.u32 2, %s22
          %s336 = ssub.s32 256, 256
          %337 = vsyncadd %s327, %s336
          %s338 = smul.addr %s21, 2
          %s339 = sadd.s32 %s334, %s338
          %s340 = smul.addr %s339, 128
          %s341 = scalar_lea.hbm %s3, %s340
          %s342 = sshll.u32 %s330, 4
          %s343 = int_to_ptr.vmem [resolvable:$true] %s342
          %348 = dma.vmem_to_hbm [thread:$0]  %s343, 256, %s341, %s327, 128, 128, 8
        $region36: #{tpu_custom_call.1} parent=31 // pred_fallthru
          _
      $region32: #{tpu_custom_call.1} parent=5 // pred_fallthru
        _
      %p349 = scmp.le.s32.totalorder 2, %s12
      // Predicated region
      $region37: #{tpu_custom_call.1} parent=5 // pred_check
        %p350 = pneg %p349
      $region38: #{tpu_custom_call.1} parent=5 // pred_check_branch
        %352 = sbr.rel (%p350) target = $region40
      $region39: #{tpu_custom_call.1} parent=5 // pred_region
        %s353 = ssub.s32 %s12, 2
        // Predicated region
        $region41: #{tpu_custom_call.1} parent=39 // pred_check
          %p354 = pneg %p125
        $region42: #{tpu_custom_call.1} parent=39 // pred_check_branch
          %356 = sbr.rel (%p354) target = $region44
        $region43: #{tpu_custom_call.1} parent=39 // pred_region
          %s357 = sand.u32 %s110, 1
          %s358 = scalar_lea.sflag [#allocation3], %s357
          %s359 = sand.u32 %s110, 1
          %s360 = smul.addr %s359, 16
          %s361 = scalar_lea.vmem [#allocation2], %s360
          %362 = dma.done %s358, 256
        $region44: #{tpu_custom_call.1} parent=39 // pred_fallthru
          _
      $region40: #{tpu_custom_call.1} parent=5 // pred_fallthru
        _
    $region6: #{tpu_custom_call.1} parent=1 // loop_footer
      %s16 = sadd.s32 1, %s12
    $region7: #{tpu_custom_call.1} parent=1 // loop_footer_branch
      %11 = sbr.rel target = $region3
    $region8: #{tpu_custom_call.1} parent=1 // loop_exit
      _
    %363 = vsyncpa [#allocation3], 1
    %s364 = scalar_lea.sflag [#allocation3], 1
    %365 = vsyncpa %s364, 1

</llo_original>
